<compile_context>
chip_gen: v7x
topology: tpu7x:2x2x1
jax: 0.10.0
libtpu: 0.0.40
codegen_flags: <defaults>
</compile_context>

<pallas_src>
import math
import functools

import jax
import jax.numpy as jnp
from jax.experimental import pallas as pl
from jax.experimental.pallas import tpu as pltpu

# The reference code uses an (undefined in the snippet) global MAX_VAL for masked_fill.
MAX_VAL = 1e9
VMEM_LIMIT = 32 * 1024 * 1024


# ----------------------------------------------------------------------------
# Dense linear kernel:  y = x @ W_t + b   (W_t pre-transposed to (K, N), bf16)
# ----------------------------------------------------------------------------
def _linear_kernel(x_ref, w_ref, b_ref, o_ref):
    x = x_ref[...].astype(jnp.bfloat16)
    o_ref[...] = (
        jnp.dot(x, w_ref[...], preferred_element_type=jnp.float32) + b_ref[...]
    )


def _pick_tile(m):
    for t in (512, 256, 128, 64, 32, 16, 8):
        if m % t == 0:
            return t
    return m


def pallas_linear(x, w_t, b):
    """y = x @ w_t + b, tiled over rows (K/N stay whole: D is small)."""
    M, K = x.shape
    N = w_t.shape[1]
    tm = _pick_tile(M)
    return pl.pallas_call(
        _linear_kernel,
        out_shape=jax.ShapeDtypeStruct((M, N), jnp.float32),
        grid=(M // tm,),
        in_specs=[pl.BlockSpec((tm, K), lambda i: (i, 0)),
                  pl.BlockSpec((K, N), lambda i: (0, 0)),
                  pl.BlockSpec((1, N), lambda i: (0, 0))],
        out_specs=pl.BlockSpec((tm, N), lambda i: (i, 0)),
        compiler_params=pltpu.CompilerParams(
            dimension_semantics=("parallel",),
            vmem_limit_bytes=VMEM_LIMIT),
    )(x, w_t, b)


# ----------------------------------------------------------------------------
# Packed multi-head attention kernel (shared by global and local head groups).
# Grid iterates over the batch; each step handles ALL heads of one batch element.
# ----------------------------------------------------------------------------
def _packed_heads_kernel(q_ref, kv_ref, wk_ref, bk_ref, wv_ref, bv_ref, bias_ref,
                         o_ref, *, num_heads, d_k):
    scale = 1.0 / math.sqrt(d_k)
    q = (q_ref[0] * scale).astype(jnp.bfloat16)        # (Lq, H*d_k), scale folded once
    kx = kv_ref[0].astype(jnp.bfloat16)                # (Lk, H*d_k) single k/v source

    # Fused per-head k/v projections: one wide block-diagonal matmul each.
    kp = (jnp.dot(kx, wk_ref[...], preferred_element_type=jnp.float32)
          + bk_ref[...]).astype(jnp.bfloat16)
    vp = (jnp.dot(kx, wv_ref[...], preferred_element_type=jnp.float32)
          + bv_ref[...]).astype(jnp.bfloat16)

    bias = bias_ref[0]                                  # (H, Lk) additive key bias

    outs = []
    for h in range(num_heads):
        sl = slice(h * d_k, (h + 1) * d_k)
        s = jnp.einsum('qd,kd->qk', q[:, sl], kp[:, sl],
                       preferred_element_type=jnp.float32)        # (Lq, Lk)
        s = s + bias[h:h + 1, :]                                   # additive mask bias
        s = s - jnp.max(s, axis=-1, keepdims=True)
        e = jnp.exp(s)
        p = e * pl.reciprocal(jnp.sum(e, axis=-1, keepdims=True), approx=True)
        outs.append(jnp.dot(p.astype(jnp.bfloat16), vp[:, sl],
                            preferred_element_type=jnp.float32))
    # Single lane-dense store of all heads of this batch element.
    o_ref[0] = jnp.concatenate(outs, axis=-1)


def packed_heads_attention(q, kv, wk_bd, bk, wv_bd, bv, bias, *, num_heads, d_k):
    """q: (B,Lq,H*dk) f32, kv: (B,Lk,H*dk) f32, wk_bd/wv_bd: (H*dk,H*dk) bf16,
    bk/bv: (1,H*dk) f32, bias: (B,H,Lk) f32 additive (0 keep / -MAX_VAL drop)."""
    B, Lq, Dh = q.shape
    Lk = kv.shape[1]
    blk = lambda b: (b, 0, 0)
    cst = lambda b: (0, 0)
    return pl.pallas_call(
        functools.partial(_packed_heads_kernel, num_heads=num_heads, d_k=d_k),
        out_shape=jax.ShapeDtypeStruct((B, Lq, Dh), jnp.float32),
        grid=(B,),
        in_specs=[pl.BlockSpec((1, Lq, Dh), blk),
                  pl.BlockSpec((1, Lk, Dh), blk),
                  pl.BlockSpec((Dh, Dh), cst),
                  pl.BlockSpec((1, Dh), cst),
                  pl.BlockSpec((Dh, Dh), cst),
                  pl.BlockSpec((1, Dh), cst),
                  pl.BlockSpec((1, num_heads, Lk), blk)],
        out_specs=pl.BlockSpec((1, Lq, Dh), blk),
        compiler_params=pltpu.CompilerParams(
            dimension_semantics=("parallel",),
            vmem_limit_bytes=VMEM_LIMIT),
    )(q, kv, wk_bd, bk, wv_bd, bv, bias)


# ----------------------------------------------------------------------------
# Parameter preparation (one-time, host side): pre-transpose, block-diagonalize,
# cast matmul weights to bf16.
# ----------------------------------------------------------------------------
def prepare_params(raw, *, global_num, local_num):
    def block_diag_t(w_list):
        n = len(w_list)
        dk = w_list[0].shape[0]
        m = jnp.zeros((n * dk, n * dk), jnp.float32)
        for i, w in enumerate(w_list):
            m = m.at[i * dk:(i + 1) * dk, i * dk:(i + 1) * dk].set(w.T)
        return m.astype(jnp.bfloat16)

    def cat_bias(b_list):
        return jnp.concatenate([b.reshape(1, -1) for b in b_list], axis=-1).astype(jnp.float32)

    p = {
        'wq_t': raw['wq'].T.astype(jnp.bfloat16),
        'bq': raw['bq'].reshape(1, -1).astype(jnp.float32),
        'wo_t': raw['wo'].T.astype(jnp.bfloat16),
        'bo': raw['bo'].reshape(1, -1).astype(jnp.float32),
        'wk_g': block_diag_t(raw['wk'][:global_num]),
        'bk_g': cat_bias(raw['bk'][:global_num]),
        'wv_g': block_diag_t(raw['wv'][:global_num]),
        'bv_g': cat_bias(raw['bv'][:global_num]),
    }
    if local_num > 0:
        p['wk_l'] = block_diag_t(raw['wk'][global_num:])
        p['bk_l'] = cat_bias(raw['bk'][global_num:])
        p['wv_l'] = block_diag_t(raw['wv'][global_num:])
        p['bv_l'] = cat_bias(raw['bv'][global_num:])
    return p


# ----------------------------------------------------------------------------
# MultiHeadedAttention.forward
# ----------------------------------------------------------------------------
def multi_headed_attention_forward(params, x, mask4d, *, h, d_k, global_num, local_num):
    B, L, D = x.shape
    Dg = global_num * d_k

    # query = self.q(x); heads live on contiguous d_k feature slices -> no transposes.
    query = pallas_linear(x.reshape(B * L, D), params['wq_t'], params['bq']).reshape(B, L, D)

    # Additive key bias from the (B,1,L,L) mask (0 keep / -MAX_VAL drop).
    # TODO(synk): assumes a key-padding mask broadcast over the query dim (standard BERT
    #             usage); a general query-dependent mask would need a (B,L,L) bias.
    key_row = mask4d[:, 0, 0, :]                                          # (B, L)
    key_bias = jnp.where(key_row == 0, -MAX_VAL, 0.0).astype(jnp.float32)

    # ---- global heads: full attention, raw x slice is both k and v source ----
    vals_g = packed_heads_attention(
        query[:, :, :Dg], x[:, :, :Dg],
        params['wk_g'], params['bk_g'], params['wv_g'], params['bv_g'],
        jnp.broadcast_to(key_bias[:, None, :], (B, global_num, L)),
        num_heads=global_num, d_k=d_k)

    if local_num == 0:
        value_all = vals_g
    else:
        # ---- local heads: window-mean pooled keys, single fused call over all heads ----
        # Pooling / window-mask prep are cheap XLA reshuffles; window counts are padded to
        # the maximum (window_size=1 -> L windows) and padded windows masked with -MAX_VAL.
        nw_max = L
        pooled_list, bias_list = [], []
        for i in range(local_num):
            ws = i + 1
            l_trim = L % ws
            nw = (L - l_trim) // ws
            k_l = x[:, :, Dg + i * d_k: Dg + (i + 1) * d_k]               # (B, L, d_k)
            pooled = k_l[:, l_trim:, :].reshape(B, nw, ws, d_k).mean(axis=2)
            pooled_list.append(jnp.pad(pooled, ((0, 0), (0, nw_max - nw), (0, 0))))
            win_valid = key_row[:, l_trim:].reshape(B, nw, ws).sum(-1) >= math.ceil(ws / 2)
            bias = jnp.where(win_valid, 0.0, -MAX_VAL)
            bias_list.append(jnp.pad(bias, ((0, 0), (0, nw_max - nw)),
                                     constant_values=-MAX_VAL))
        pooled_all = jnp.concatenate(pooled_list, axis=-1)                # (B, NWmax, Ln*d_k)
        win_bias = jnp.stack(bias_list, axis=1).astype(jnp.float32)       # (B, Ln, NWmax)
        vals_l = packed_heads_attention(
            query[:, :, Dg:], pooled_all,
            params['wk_l'], params['bk_l'], params['wv_l'], params['bv_l'],
            win_bias, num_heads=local_num, d_k=d_k)
        value_all = jnp.concatenate([vals_g, vals_l], axis=-1)            # (B, L, D)

    # == value_all.transpose(1,2).view(B,-1,h*d_k) followed by output_linear
    out = pallas_linear(value_all.reshape(B * L, D), params['wo_t'], params['bo'])
    return out.reshape(B, L, D)


# ----------------------------------------------------------------------------
# Pure-JAX reference (mirrors the PyTorch module, f32, eval-mode dropout).
# ----------------------------------------------------------------------------
def reference_forward(raw, x, mask4d, *, h, d_k, global_num, local_num):
    B, L, D = x.shape
    query = x @ raw['wq'].T + raw['bq']
    q = query.reshape(B, L, h, d_k).transpose(0, 2, 1, 3)
    k = x.reshape(B, L, h, d_k).transpose(0, 2, 1, 3)
    mask3 = mask4d[:, 0]
    vals = []
    for hi in range(global_num):
        kp = k[:, hi] @ raw['wk'][hi].T + raw['bk'][hi]
        vp = k[:, hi] @ raw['wv'][hi].T + raw['bv'][hi]
        s = jnp.einsum('bqd,bkd->bqk', q[:, hi], kp) / math.sqrt(d_k)
        s = jnp.where(mask3 == 0, -MAX_VAL, s)
        vals.append(jax.nn.softmax(s, axis=-1) @ vp)
    for i in range(local_num):
        hi = global_num + i
        ws = i + 1
        lt = L % ws
        nw = (L - lt) // ws
        kw = k[:, hi][:, lt:, :].reshape(B, nw, ws, d_k).mean(axis=2)
        kp = kw @ raw['wk'][hi].T + raw['bk'][hi]
        vp = kw @ raw['wv'][hi].T + raw['bv'][hi]
        s = jnp.einsum('bqd,bkd->bqk', q[:, hi], kp) / math.sqrt(d_k)
        wm = mask3[:, :, lt:].reshape(B, L, nw, ws).sum(-1) >= math.ceil(ws / 2)
        s = jnp.where(wm, s, -MAX_VAL)
        vals.append(jax.nn.softmax(s, axis=-1) @ vp)
    value_all = jnp.stack(vals, axis=1)                                   # (B, H, L, d_k)
    xc = value_all.transpose(0, 2, 1, 3).reshape(B, L, h * d_k)
    return xc @ raw['wo'].T + raw['bo']


# ----------------------------------------------------------------------------
if __name__ == "__main__":
    B, L, D, H = 2, 16, 32, 4
    d_k = D // H
    global_num, local_num = 2, 2          # args.bert_num_heads=4, args.local_num_heads=2

    key = jax.random.PRNGKey(0)
    keys = jax.random.split(key, 2 + 2 * H + 1)

    def init_linear(kk, d_out, d_in):
        k1, k2 = jax.random.split(kk)
        bound = 1.0 / math.sqrt(d_in)
        w = jax.random.uniform(k1, (d_out, d_in), jnp.float32, -bound, bound)
        b_ = jax.random.uniform(k2, (d_out,), jnp.float32, -bound, bound)
        return w, b_

    wq, bq = init_linear(keys[0], D, D)
    wo, bo = init_linear(keys[1], D, D)
    wk_list, bk_list, wv_list, bv_list = [], [], [], []
    for i in range(H):
        w, b_ = init_linear(keys[2 + i], d_k, d_k)
        wk_list.append(w); bk_list.append(b_)
        w, b_ = init_linear(keys[2 + H + i], d_k, d_k)
        wv_list.append(w); bv_list.append(b_)

    raw = dict(wq=wq, bq=bq, wo=wo, bo=bo,
               wk=wk_list, bk=bk_list, wv=wv_list, bv=bv_list)
    params = prepare_params(raw, global_num=global_num, local_num=local_num)

    x = jax.random.normal(keys[-1], (B, L, D), jnp.float32)

    # Padding-style attention mask of shape (B, 1, L, L): key j valid if j < valid_len[b].
    valid_len = jnp.array([16, 12], dtype=jnp.int32)
    key_mask = (jnp.arange(L)[None, :] < valid_len[:, None]).astype(jnp.float32)
    mask4d = jnp.broadcast_to(key_mask[:, None, None, :], (B, 1, L, L))

    fwd = jax.jit(functools.partial(multi_headed_attention_forward,
                                    h=H, d_k=d_k,
                                    global_num=global_num, local_num=local_num))
    out = fwd(params, x, mask4d)
    jax.block_until_ready(out)
    assert out.shape == (B, L, D)

    out_ref = reference_forward(raw, x, mask4d, h=H, d_k=d_k,
                                global_num=global_num, local_num=local_num)
    err = float(jnp.max(jnp.abs(out - out_ref)))
    assert err < 0.1, f"max abs error vs reference too large: {err}"
    print("KERNEL_OK")
</pallas_src>

<mosaic_0001>
module attributes {stable_mosaic.version = 11 : i64} {
  func.func @_linear_kernel(%arg0: i32, %arg1: memref<32x32xf32, #tpu.memory_space<vmem>>, %arg2: memref<32x32xbf16, #tpu.memory_space<vmem>>, %arg3: memref<1x32xf32, #tpu.memory_space<vmem>>, %arg4: memref<32x32xf32, #tpu.memory_space<vmem>>) attributes {dimension_semantics = [#tpu.dimension_semantics<parallel>], iteration_bounds = array<i64: 1>, scalar_prefetch = 0 : i64, scratch_operands = 0 : i64, tpu.core_type = #tpu.core_type<tc>, window_params = [{transform_indices = @transform_0, window_bounds = array<i64: 32, 32>}, {pipeline_mode = #tpu.pipeline_mode<synchronous>, transform_indices = @transform_1, window_bounds = array<i64: 32, 32>}, {pipeline_mode = #tpu.pipeline_mode<synchronous>, transform_indices = @transform_2, window_bounds = array<i64: 1, 32>}, {transform_indices = @transform_3, window_bounds = array<i64: 32, 32>}]} {
    %c0 = arith.constant 0 : index
    %c0_0 = arith.constant 0 : index
    %0 = vector.load %arg1[%c0, %c0_0] : memref<32x32xf32, #tpu.memory_space<vmem>>, vector<32x32xf32>
    %1 = arith.truncf %0 : vector<32x32xf32> to vector<32x32xbf16>
    %c0_1 = arith.constant 0 : index
    %c0_2 = arith.constant 0 : index
    %2 = vector.load %arg2[%c0_1, %c0_2] : memref<32x32xbf16, #tpu.memory_space<vmem>>, vector<32x32xbf16>
    %cst = arith.constant dense<0.000000e+00> : vector<32x32xf32>
    %3 = tpu.matmul %1, %2, %cst {dimension_numbers = #tpu.dot_dimension_numbers<[1], [0], [0], [1], [0, 0, 1, 1], [], []>} : vector<32x32xbf16>, vector<32x32xbf16>, vector<32x32xf32> -> vector<32x32xf32>
    %c0_3 = arith.constant 0 : index
    %c0_4 = arith.constant 0 : index
    %4 = vector.load %arg3[%c0_3, %c0_4] : memref<1x32xf32, #tpu.memory_space<vmem>>, vector<1x32xf32>
    %5 = vector.broadcast %4 : vector<1x32xf32> to vector<32x32xf32>
    %6 = arith.addf %3, %5 : vector<32x32xf32>
    %c0_5 = arith.constant 0 : index
    %c0_6 = arith.constant 0 : index
    %7 = vector.load %arg4[%c0_5, %c0_6] : memref<32x32xf32, #tpu.memory_space<vmem>>, vector<32x32xf32>
    tpu.vector_store %arg4[%c0_5, %c0_6], %6 {strides = array<i32>} : memref<32x32xf32, #tpu.memory_space<vmem>>, vector<32x32xf32>,
    return
  }
  func.func @transform_0(%arg0: i32) -> (i32, i32) {
    %c0_i32 = arith.constant 0 : i32
    %c0_i32_0 = arith.constant 0 : i32
    return %arg0, %c0_i32 : i32, i32
  }
  func.func @transform_1(%arg0: i32) -> (i32, i32) {
    %c0_i32 = arith.constant 0 : i32
    %c0_i32_0 = arith.constant 0 : i32
    %c0_i32_1 = arith.constant 0 : i32
    return %c0_i32, %c0_i32_0 : i32, i32
  }
  func.func @transform_2(%arg0: i32) -> (i32, i32) {
    %c0_i32 = arith.constant 0 : i32
    %c0_i32_0 = arith.constant 0 : i32
    %c0_i32_1 = arith.constant 0 : i32
    return %c0_i32, %c0_i32_0 : i32, i32
  }
  func.func @transform_3(%arg0: i32) -> (i32, i32) {
    %c0_i32 = arith.constant 0 : i32
    %c0_i32_0 = arith.constant 0 : i32
    return %arg0, %c0_i32 : i32, i32
  }
}

module attributes {stable_mosaic.version = 11 : i64} {
  func.func @_packed_heads_kernel(%arg0: i32, %arg1: memref<1x16x16xf32, #tpu.memory_space<vmem>>, %arg2: memref<1x16x16xf32, #tpu.memory_space<vmem>>, %arg3: memref<16x16xbf16, #tpu.memory_space<vmem>>, %arg4: memref<1x16xf32, #tpu.memory_space<vmem>>, %arg5: memref<16x16xbf16, #tpu.memory_space<vmem>>, %arg6: memref<1x16xf32, #tpu.memory_space<vmem>>, %arg7: memref<1x2x16xf32, #tpu.memory_space<vmem>>, %arg8: memref<1x16x16xf32, #tpu.memory_space<vmem>>) attributes {dimension_semantics = [#tpu.dimension_semantics<parallel>], iteration_bounds = array<i64: 2>, scalar_prefetch = 0 : i64, scratch_operands = 0 : i64, tpu.core_type = #tpu.core_type<tc>, window_params = [{transform_indices = @transform_0, window_bounds = array<i64: 1, 16, 16>}, {transform_indices = @transform_1, window_bounds = array<i64: 1, 16, 16>}, {pipeline_mode = #tpu.pipeline_mode<synchronous>, transform_indices = @transform_2, window_bounds = array<i64: 16, 16>}, {pipeline_mode = #tpu.pipeline_mode<synchronous>, transform_indices = @transform_3, window_bounds = array<i64: 1, 16>}, {pipeline_mode = #tpu.pipeline_mode<synchronous>, transform_indices = @transform_4, window_bounds = array<i64: 16, 16>}, {pipeline_mode = #tpu.pipeline_mode<synchronous>, transform_indices = @transform_5, window_bounds = array<i64: 1, 16>}, {transform_indices = @transform_6, window_bounds = array<i64: 1, 2, 16>}, {transform_indices = @transform_7, window_bounds = array<i64: 1, 16, 16>}]} {
    %c0 = arith.constant 0 : index
    %c0_0 = arith.constant 0 : index
    %c0_1 = arith.constant 0 : index
    %0 = vector.load %arg1[%c0, %c0_0, %c0_1] : memref<1x16x16xf32, #tpu.memory_space<vmem>>, vector<1x16x16xf32>
    %1 = vector.shape_cast %0 : vector<1x16x16xf32> to vector<16x16xf32>
    %cst = arith.constant 0.353553385 : f32
    %2 = vector.broadcast %cst : f32 to vector<16x16xf32>
    %3 = arith.mulf %1, %2 : vector<16x16xf32>
    %4 = arith.truncf %3 : vector<16x16xf32> to vector<16x16xbf16>
    %c0_2 = arith.constant 0 : index
    %c0_3 = arith.constant 0 : index
    %c0_4 = arith.constant 0 : index
    %5 = vector.load %arg2[%c0_2, %c0_3, %c0_4] : memref<1x16x16xf32, #tpu.memory_space<vmem>>, vector<1x16x16xf32>
    %6 = vector.shape_cast %5 : vector<1x16x16xf32> to vector<16x16xf32>
    %7 = arith.truncf %6 : vector<16x16xf32> to vector<16x16xbf16>
    %c0_5 = arith.constant 0 : index
    %c0_6 = arith.constant 0 : index
    %8 = vector.load %arg3[%c0_5, %c0_6] : memref<16x16xbf16, #tpu.memory_space<vmem>>, vector<16x16xbf16>
    %cst_7 = arith.constant dense<0.000000e+00> : vector<16x16xf32>
    %9 = tpu.matmul %7, %8, %cst_7 {dimension_numbers = #tpu.dot_dimension_numbers<[1], [0], [0], [1], [0, 0, 1, 1], [], []>} : vector<16x16xbf16>, vector<16x16xbf16>, vector<16x16xf32> -> vector<16x16xf32>
    %c0_8 = arith.constant 0 : index
    %c0_9 = arith.constant 0 : index
    %10 = vector.load %arg4[%c0_8, %c0_9] : memref<1x16xf32, #tpu.memory_space<vmem>>, vector<1x16xf32>
    %11 = vector.broadcast %10 : vector<1x16xf32> to vector<16x16xf32>
    %12 = arith.addf %9, %11 : vector<16x16xf32>
    %13 = arith.truncf %12 : vector<16x16xf32> to vector<16x16xbf16>
    %c0_10 = arith.constant 0 : index
    %c0_11 = arith.constant 0 : index
    %14 = vector.load %arg5[%c0_10, %c0_11] : memref<16x16xbf16, #tpu.memory_space<vmem>>, vector<16x16xbf16>
    %cst_12 = arith.constant dense<0.000000e+00> : vector<16x16xf32>
    %15 = tpu.matmul %7, %14, %cst_12 {dimension_numbers = #tpu.dot_dimension_numbers<[1], [0], [0], [1], [0, 0, 1, 1], [], []>} : vector<16x16xbf16>, vector<16x16xbf16>, vector<16x16xf32> -> vector<16x16xf32>
    %c0_13 = arith.constant 0 : index
    %c0_14 = arith.constant 0 : index
    %16 = vector.load %arg6[%c0_13, %c0_14] : memref<1x16xf32, #tpu.memory_space<vmem>>, vector<1x16xf32>
    %17 = vector.broadcast %16 : vector<1x16xf32> to vector<16x16xf32>
    %18 = arith.addf %15, %17 : vector<16x16xf32>
    %19 = arith.truncf %18 : vector<16x16xf32> to vector<16x16xbf16>
    %c0_15 = arith.constant 0 : index
    %c0_16 = arith.constant 0 : index
    %c0_17 = arith.constant 0 : index
    %20 = vector.load %arg7[%c0_15, %c0_16, %c0_17] : memref<1x2x16xf32, #tpu.memory_space<vmem>>, vector<1x2x16xf32>
    %21 = vector.shape_cast %20 : vector<1x2x16xf32> to vector<2x16xf32>
    %22 = vector.extract_strided_slice %4 {offsets = [0, 0], sizes = [16, 8], strides = [1, 1]} : vector<16x16xbf16> to vector<16x8xbf16>
    %23 = vector.extract_strided_slice %13 {offsets = [0, 0], sizes = [16, 8], strides = [1, 1]} : vector<16x16xbf16> to vector<16x8xbf16>
    "tpu.trace_start"() <{level = 10 : i32, message = "qd,kd->qk"}> : () -> ()
    %cst_18 = arith.constant dense<0.000000e+00> : vector<16x16xf32>
    %24 = tpu.matmul %22, %23, %cst_18 {dimension_numbers = #tpu.dot_dimension_numbers<[1], [1], [0], [0], [0, 0, 1, 0], [], []>} : vector<16x8xbf16>, vector<16x8xbf16>, vector<16x16xf32> -> vector<16x16xf32>
    "tpu.trace_stop"() : () -> ()
    %25 = vector.extract_strided_slice %21 {offsets = [0, 0], sizes = [1, 16], strides = [1, 1]} : vector<2x16xf32> to vector<1x16xf32>
    %26 = vector.broadcast %25 : vector<1x16xf32> to vector<16x16xf32>
    %27 = arith.addf %24, %26 : vector<16x16xf32>
    %cst_19 = arith.constant dense<0xFF800000> : vector<16xf32>
    %28 = vector.multi_reduction <maximumf>, %27, %cst_19 [1] : vector<16x16xf32> to vector<16xf32>
    %29 = vector.shape_cast %28 : vector<16xf32> to vector<16x1xf32>
    %30 = vector.broadcast %29 : vector<16x1xf32> to vector<16x16xf32>
    %31 = arith.subf %27, %30 : vector<16x16xf32>
    %32 = math.exp %31 : vector<16x16xf32>
    %cst_20 = arith.constant dense<0.000000e+00> : vector<16xf32>
    %33 = vector.multi_reduction <add>, %32, %cst_20 [1] : vector<16x16xf32> to vector<16xf32>
    %34 = vector.shape_cast %33 : vector<16xf32> to vector<16x1xf32>
    %35 = tpu.reciprocal %34 {approx = true} : vector<16x1xf32> -> vector<16x1xf32>
    %36 = vector.broadcast %35 : vector<16x1xf32> to vector<16x16xf32>
    %37 = arith.mulf %32, %36 : vector<16x16xf32>
    %38 = arith.truncf %37 : vector<16x16xf32> to vector<16x16xbf16>
    %39 = vector.extract_strided_slice %19 {offsets = [0, 0], sizes = [16, 8], strides = [1, 1]} : vector<16x16xbf16> to vector<16x8xbf16>
    %cst_21 = arith.constant dense<0.000000e+00> : vector<16x8xf32>
    %40 = tpu.matmul %38, %39, %cst_21 {dimension_numbers = #tpu.dot_dimension_numbers<[1], [0], [0], [1], [0, 0, 1, 1], [], []>} : vector<16x16xbf16>, vector<16x8xbf16>, vector<16x8xf32> -> vector<16x8xf32>
    %41 = vector.extract_strided_slice %4 {offsets = [0, 8], sizes = [16, 8], strides = [1, 1]} : vector<16x16xbf16> to vector<16x8xbf16>
    %42 = vector.extract_strided_slice %13 {offsets = [0, 8], sizes = [16, 8], strides = [1, 1]} : vector<16x16xbf16> to vector<16x8xbf16>
    "tpu.trace_start"() <{level = 10 : i32, message = "qd,kd->qk"}> : () -> ()
    %cst_22 = arith.constant dense<0.000000e+00> : vector<16x16xf32>
    %43 = tpu.matmul %41, %42, %cst_22 {dimension_numbers = #tpu.dot_dimension_numbers<[1], [1], [0], [0], [0, 0, 1, 0], [], []>} : vector<16x8xbf16>, vector<16x8xbf16>, vector<16x16xf32> -> vector<16x16xf32>
    "tpu.trace_stop"() : () -> ()
    %44 = vector.extract_strided_slice %21 {offsets = [1, 0], sizes = [1, 16], strides = [1, 1]} : vector<2x16xf32> to vector<1x16xf32>
    %45 = vector.broadcast %44 : vector<1x16xf32> to vector<16x16xf32>
    %46 = arith.addf %43, %45 : vector<16x16xf32>
    %cst_23 = arith.constant dense<0xFF800000> : vector<16xf32>
    %47 = vector.multi_reduction <maximumf>, %46, %cst_23 [1] : vector<16x16xf32> to vector<16xf32>
    %48 = vector.shape_cast %47 : vector<16xf32> to vector<16x1xf32>
    %49 = vector.broadcast %48 : vector<16x1xf32> to vector<16x16xf32>
    %50 = arith.subf %46, %49 : vector<16x16xf32>
    %51 = math.exp %50 : vector<16x16xf32>
    %cst_24 = arith.constant dense<0.000000e+00> : vector<16xf32>
    %52 = vector.multi_reduction <add>, %51, %cst_24 [1] : vector<16x16xf32> to vector<16xf32>
    %53 = vector.shape_cast %52 : vector<16xf32> to vector<16x1xf32>
    %54 = tpu.reciprocal %53 {approx = true} : vector<16x1xf32> -> vector<16x1xf32>
    %55 = vector.broadcast %54 : vector<16x1xf32> to vector<16x16xf32>
    %56 = arith.mulf %51, %55 : vector<16x16xf32>
    %57 = arith.truncf %56 : vector<16x16xf32> to vector<16x16xbf16>
    %58 = vector.extract_strided_slice %19 {offsets = [0, 8], sizes = [16, 8], strides = [1, 1]} : vector<16x16xbf16> to vector<16x8xbf16>
    %cst_25 = arith.constant dense<0.000000e+00> : vector<16x8xf32>
    %59 = tpu.matmul %57, %58, %cst_25 {dimension_numbers = #tpu.dot_dimension_numbers<[1], [0], [0], [1], [0, 0, 1, 1], [], []>} : vector<16x16xbf16>, vector<16x8xbf16>, vector<16x8xf32> -> vector<16x8xf32>
    %60 = tpu.concatenate %40, %59 in 1 : vector<16x8xf32>, vector<16x8xf32> -> vector<16x16xf32>
    %c0_26 = arith.constant 0 : index
    %c0_27 = arith.constant 0 : index
    %c0_28 = arith.constant 0 : index
    %61 = vector.load %arg8[%c0_26, %c0_27, %c0_28] : memref<1x16x16xf32, #tpu.memory_space<vmem>>, vector<1x16x16xf32>
    %62 = vector.shape_cast %61 : vector<1x16x16xf32> to vector<16x16xf32>
    %63 = vector.shape_cast %60 : vector<16x16xf32> to vector<1x16x16xf32>
    tpu.vector_store %arg8[%c0_26, %c0_27, %c0_28], %63 {strides = array<i32>} : memref<1x16x16xf32, #tpu.memory_space<vmem>>, vector<1x16x16xf32>,
    return
  }
  func.func @transform_0(%arg0: i32) -> (i32, i32, i32) {
    %c0_i32 = arith.constant 0 : i32
    %c0_i32_0 = arith.constant 0 : i32
    %c0_i32_1 = arith.constant 0 : i32
    return %arg0, %c0_i32, %c0_i32_0 : i32, i32, i32
  }
  func.func @transform_1(%arg0: i32) -> (i32, i32, i32) {
    %c0_i32 = arith.constant 0 : i32
    %c0_i32_0 = arith.constant 0 : i32
    %c0_i32_1 = arith.constant 0 : i32
    return %arg0, %c0_i32, %c0_i32_0 : i32, i32, i32
  }
  func.func @transform_2(%arg0: i32) -> (i32, i32) {
    %c0_i32 = arith.constant 0 : i32
    %c0_i32_0 = arith.constant 0 : i32
    %c0_i32_1 = arith.constant 0 : i32
    return %c0_i32, %c0_i32_0 : i32, i32
  }
  func.func @transform_3(%arg0: i32) -> (i32, i32) {
    %c0_i32 = arith.constant 0 : i32
    %c0_i32_0 = arith.constant 0 : i32
    %c0_i32_1 = arith.constant 0 : i32
    return %c0_i32, %c0_i32_0 : i32, i32
  }
  func.func @transform_4(%arg0: i32) -> (i32, i32) {
    %c0_i32 = arith.constant 0 : i32
    %c0_i32_0 = arith.constant 0 : i32
    %c0_i32_1 = arith.constant 0 : i32
    return %c0_i32, %c0_i32_0 : i32, i32
  }
  func.func @transform_5(%arg0: i32) -> (i32, i32) {
    %c0_i32 = arith.constant 0 : i32
    %c0_i32_0 = arith.constant 0 : i32
    %c0_i32_1 = arith.constant 0 : i32
    return %c0_i32, %c0_i32_0 : i32, i32
  }
  func.func @transform_6(%arg0: i32) -> (i32, i32, i32) {
    %c0_i32 = arith.constant 0 : i32
    %c0_i32_0 = arith.constant 0 : i32
    %c0_i32_1 = arith.constant 0 : i32
    return %arg0, %c0_i32, %c0_i32_0 : i32, i32, i32
  }
  func.func @transform_7(%arg0: i32) -> (i32, i32, i32) {
    %c0_i32 = arith.constant 0 : i32
    %c0_i32_0 = arith.constant 0 : i32
    %c0_i32_1 = arith.constant 0 : i32
    return %arg0, %c0_i32, %c0_i32_0 : i32, i32, i32
  }
}

module attributes {stable_mosaic.version = 11 : i64} {
  func.func @_linear_kernel(%arg0: i32, %arg1: memref<32x32xf32, #tpu.memory_space<vmem>>, %arg2: memref<32x32xbf16, #tpu.memory_space<vmem>>, %arg3: memref<1x32xf32, #tpu.memory_space<vmem>>, %arg4: memref<32x32xf32, #tpu.memory_space<vmem>>) attributes {dimension_semantics = [#tpu.dimension_semantics<parallel>], iteration_bounds = array<i64: 1>, scalar_prefetch = 0 : i64, scratch_operands = 0 : i64, tpu.core_type = #tpu.core_type<tc>, window_params = [{transform_indices = @transform_0, window_bounds = array<i64: 32, 32>}, {pipeline_mode = #tpu.pipeline_mode<synchronous>, transform_indices = @transform_1, window_bounds = array<i64: 32, 32>}, {pipeline_mode = #tpu.pipeline_mode<synchronous>, transform_indices = @transform_2, window_bounds = array<i64: 1, 32>}, {transform_indices = @transform_3, window_bounds = array<i64: 32, 32>}]} {
    %c0 = arith.constant 0 : index
    %c0_0 = arith.constant 0 : index
    %0 = vector.load %arg1[%c0, %c0_0] : memref<32x32xf32, #tpu.memory_space<vmem>>, vector<32x32xf32>
    %1 = arith.truncf %0 : vector<32x32xf32> to vector<32x32xbf16>
    %c0_1 = arith.constant 0 : index
    %c0_2 = arith.constant 0 : index
    %2 = vector.load %arg2[%c0_1, %c0_2] : memref<32x32xbf16, #tpu.memory_space<vmem>>, vector<32x32xbf16>
    %cst = arith.constant dense<0.000000e+00> : vector<32x32xf32>
    %3 = tpu.matmul %1, %2, %cst {dimension_numbers = #tpu.dot_dimension_numbers<[1], [0], [0], [1], [0, 0, 1, 1], [], []>} : vector<32x32xbf16>, vector<32x32xbf16>, vector<32x32xf32> -> vector<32x32xf32>
    %c0_3 = arith.constant 0 : index
    %c0_4 = arith.constant 0 : index
    %4 = vector.load %arg3[%c0_3, %c0_4] : memref<1x32xf32, #tpu.memory_space<vmem>>, vector<1x32xf32>
    %5 = vector.broadcast %4 : vector<1x32xf32> to vector<32x32xf32>
    %6 = arith.addf %3, %5 : vector<32x32xf32>
    %c0_5 = arith.constant 0 : index
    %c0_6 = arith.constant 0 : index
    %7 = vector.load %arg4[%c0_5, %c0_6] : memref<32x32xf32, #tpu.memory_space<vmem>>, vector<32x32xf32>
    tpu.vector_store %arg4[%c0_5, %c0_6], %6 {strides = array<i32>} : memref<32x32xf32, #tpu.memory_space<vmem>>, vector<32x32xf32>,
    return
  }
  func.func @transform_0(%arg0: i32) -> (i32, i32) {
    %c0_i32 = arith.constant 0 : i32
    %c0_i32_0 = arith.constant 0 : i32
    return %arg0, %c0_i32 : i32, i32
  }
  func.func @transform_1(%arg0: i32) -> (i32, i32) {
    %c0_i32 = arith.constant 0 : i32
    %c0_i32_0 = arith.constant 0 : i32
    %c0_i32_1 = arith.constant 0 : i32
    return %c0_i32, %c0_i32_0 : i32, i32
  }
  func.func @transform_2(%arg0: i32) -> (i32, i32) {
    %c0_i32 = arith.constant 0 : i32
    %c0_i32_0 = arith.constant 0 : i32
    %c0_i32_1 = arith.constant 0 : i32
    return %c0_i32, %c0_i32_0 : i32, i32
  }
  func.func @transform_3(%arg0: i32) -> (i32, i32) {
    %c0_i32 = arith.constant 0 : i32
    %c0_i32_0 = arith.constant 0 : i32
    return %arg0, %c0_i32 : i32, i32
  }
}

</mosaic_0001>

<llo_original>
// kernel: squeeze.5
$region0: #{squeeze.5}
  %s0 = inlined_call_operand.vmem [shape: f32[2,16], index: 0, kind: input, shape index: {}]
  %s1 = inlined_call_operand.vmem [shape: f32[2,8,2], index: 1, kind: output, shape index: {}]
  $region1: #{squeeze.5} parent=0
    #allocation0 [shape = 'u8[4096]{0}', space=vmem, size = 0x1000, scoped, tag = 'scoped mem for input reshape']
    %s3 = sshllo.u32 0, 2
    %v4 = vld [vmem:[%s0] sm:%s3]
    %5 = vst [vmem:[#allocation0] sm:%s3] %v4
    %v6 = vld [vmem:[#allocation0] sm:$0x3]
    %vm7 = vcmask 15360
    %8 = vst.msk [vmem:[%s1] ss:$8 sm:$0x3] %vm7, %v6
    %v9 = vld [vmem:[#allocation0] sm:$0x3]
    %10 = vrot.lane.b32.xlu0 %v9, 126
    %v11 = vpop.permute.xlu0 %10
    %vm12 = vcmask 15360
    %s13 = scalar_lea.vmem %s1, 1
    %14 = vst.msk [vmem:[%s13] ss:$8 sm:$0x3] %vm12, %v11
    %v15 = vld [vmem:[#allocation0] sm:$0x3]
    %16 = vrot.lane.b32.xlu0 %v15, 124
    %v17 = vpop.permute.xlu0 %16
    %vm18 = vcmask 15360
    %s19 = scalar_lea.vmem %s1, 2
    %20 = vst.msk [vmem:[%s19] ss:$8 sm:$0x3] %vm18, %v17
    %v21 = vld [vmem:[#allocation0] sm:$0x3]
    %22 = vrot.lane.b32.xlu0 %v21, 122
    %v23 = vpop.permute.xlu0 %22
    %vm24 = vcmask 15360
    %s25 = scalar_lea.vmem %s1, 3
    %26 = vst.msk [vmem:[%s25] ss:$8 sm:$0x3] %vm24, %v23
    %v27 = vld [vmem:[#allocation0] sm:$0x3]
    %28 = vrot.lane.b32.xlu0 %v27, 120
    %v29 = vpop.permute.xlu0 %28
    %vm30 = vcmask 15360
    %s31 = scalar_lea.vmem %s1, 4
    %32 = vst.msk [vmem:[%s31] ss:$8 sm:$0x3] %vm30, %v29
    %v33 = vld [vmem:[#allocation0] sm:$0x3]
    %34 = vrot.lane.b32.xlu0 %v33, 118
    %v35 = vpop.permute.xlu0 %34
    %vm36 = vcmask 15360
    %s37 = scalar_lea.vmem %s1, 5
    %38 = vst.msk [vmem:[%s37] ss:$8 sm:$0x3] %vm36, %v35
    %v39 = vld [vmem:[#allocation0] sm:$0x3]
    %40 = vrot.lane.b32.xlu0 %v39, 116
    %v41 = vpop.permute.xlu0 %40
    %vm42 = vcmask 15360
    %s43 = scalar_lea.vmem %s1, 6
    %44 = vst.msk [vmem:[%s43] ss:$8 sm:$0x3] %vm42, %v41
    %v45 = vld [vmem:[#allocation0] sm:$0x3]
    %46 = vrot.lane.b32.xlu0 %v45, 114
    %v47 = vpop.permute.xlu0 %46
    %vm48 = vcmask 15360
    %s49 = scalar_lea.vmem %s1, 7
    %50 = vst.msk [vmem:[%s49] ss:$8 sm:$0x3] %vm48, %v47

// kernel: multi_headed_attention_forward.4
$region0: #{multi_headed_attention_forward.4}
  #allocation0 [shape = 'u32[]', space=smem, size = 0x4, offset = 0x4, fixed_abs, tag = 'smem constant byte address 0x4 - core index']
  #allocation1 [shape = 'u32[144,128]{1,0:T(1,128)}', space=vmem, size = 0x12000, scoped, tag = 'internal scratch']
  %s0 = inlined_call_operand.vmem [shape: f32[32,32], index: 0, kind: input, shape index: {}]
  %s1 = inlined_call_operand.vmem [shape: bf16[32,32], index: 1, kind: input, shape index: {}]
  %s2 = inlined_call_operand.vmem [shape: f32[1,32], index: 2, kind: input, shape index: {}]
  %s3 = inlined_call_operand.vmem [shape: f32[32,32], index: 3, kind: output, shape index: {}]
  %s4 = sld [smem:[#allocation0]]
  $region22: #{multi_headed_attention_forward.4} parent=0
    _
  %s6 = ssub.s32 1, %s4
  %s7 = scalar_select 0, %s6, %s4
  // Predicated region
  $region2: #{multi_headed_attention_forward.4} parent=0 // pred_check
    _
  $region3: #{multi_headed_attention_forward.4} parent=0 // pred_check_branch
    %9 = sbr.rel (0) target = $region5
  $region4: #{multi_headed_attention_forward.4} parent=0 // pred_region
    _
  $region5: #{multi_headed_attention_forward.4} parent=0 // pred_fallthru
    _
  // Predicated region
  $region6: #{multi_headed_attention_forward.4} parent=0 // pred_check
    _
  $region7: #{multi_headed_attention_forward.4} parent=0 // pred_check_branch
    %11 = sbr.rel (0) target = $region9
  $region8: #{multi_headed_attention_forward.4} parent=0 // pred_region
    _
  $region9: #{multi_headed_attention_forward.4} parent=0 // pred_fallthru
    _
  // Predicated region
  $region10: #{multi_headed_attention_forward.4} parent=0 // pred_check
    _
  $region11: #{multi_headed_attention_forward.4} parent=0 // pred_check_branch
    %13 = sbr.rel (0) target = $region13
  $region12: #{multi_headed_attention_forward.4} parent=0 // pred_region
    _
  $region13: #{multi_headed_attention_forward.4} parent=0 // pred_fallthru
    _
  %v15 = vld [vmem:[%s0] sm:$0xff]
  %v16 = vld [vmem:[%s0 + $0x8] sm:$0xff]
  %v17 = vld [vmem:[%s0 + $0x10] sm:$0xff]
  %v18 = vld [vmem:[%s0 + $0x18] sm:$0xff]
  %v19 = vpack.c.bf16 %v16, %v15
  %v20 = vpack.c.bf16 %v18, %v17
  %v21 = vld [vmem:[%s1] sm:$0xf]
  %v22 = vld [vmem:[%s1 + $0x4] sm:$0xf]
  %v23 = vld [vmem:[%s1 + $0x8] sm:$0xf]
  %v24 = vld [vmem:[%s1 + $0xc] sm:$0xf]
  %v25 = vld [vmem:[%s2] sm:$0x1]
  %v27 = vlaneseq
  %v28 = vshrl.u32 %v27, 7
  %v29 = vsub.s32 0, %v28
  %v30 = vrot.slane %v25, %v29
  %v36 = vunpack.c.l.b16 %v21
  %v37 = vunpack.c.l.b16 %v22
  %v38 = vunpack.c.l.b16 %v23
  %v39 = vunpack.c.l.b16 %v24
  %v40 = vpack.c.b16 %v37, %v36
  %v41 = vpack.c.b16 %v39, %v38
  %vm44 = vcmask 261120
  %v46 = vsel %vm44, %v19, 0
  %v49 = vsel %vm44, %v20, 0
  %51 = vmatprep.subr.bf16.mxu0 0
  %52 = vmatpush1.bf16.msra.mxu0 %v40
  %53 = vmatprep.subr.bf16.mxu0 0
  %54 = vmatpush1.bf16.msra.mxu0 %v41
  %55 = vmatprep.subr.bf16.mxu0 0
  %56 = vmatpush1.bf16.msra.mxu0 0
  %57 = vmatprep.subr.bf16.mxu0 0
  %58 = vmatpush1.bf16.msra.mxu0 0
  %59 = vmatprep.subr.bf16.mxu0 0
  %60 = vmatpush1.bf16.msra.mxu0 0
  %61 = vmatprep.subr.bf16.mxu0 0
  %62 = vmatpush1.bf16.msra.mxu0 0
  %63 = vmatprep.subr.bf16.mxu0 0
  %64 = vmatpush1.bf16.msra.mxu0 0
  %65 = vmatprep.subr.bf16.mxu0 0
  %66 = vmatpush1.bf16.msra.mxu0 0
  %67 = vmatprep.subr.bf16.mxu0 0
  %68 = vmatpush1.bf16.msra.mxu0 0
  %69 = vmatprep.subr.bf16.mxu0 0
  %70 = vmatpush1.bf16.msra.mxu0 0
  %71 = vmatprep.subr.bf16.mxu0 0
  %72 = vmatpush1.bf16.msra.mxu0 0
  %73 = vmatprep.subr.bf16.mxu0 0
  %74 = vmatpush1.bf16.msra.mxu0 0
  %75 = vmatprep.subr.bf16.mxu0 0
  %76 = vmatpush1.bf16.msra.mxu0 0
  %77 = vmatprep.subr.bf16.mxu0 0
  %78 = vmatpush1.bf16.msra.mxu0 0
  %79 = vmatprep.subr.bf16.mxu0 0
  %80 = vmatpush1.bf16.msra.mxu0 0
  %81 = vmatprep.subr.bf16.mxu0 0
  %82 = vmatpush1.bf16.msra.mxu0 0
  %83 = vmatprep.mubr.bf16.mxu0 0
  %84 = vmatmul.mubr.bf16.gmra.mrb[0].mxu0 %v46
  %v85 = vpop.f32.mrb[0].mxu0
  %v86 = vadd.f32 %v30, %v85
  %v87 = vpop.f32.mrb[0].mxu0
  %v88 = vpop.f32.mrb[0].mxu0
  %v89 = vadd.f32 %v30, %v88
  %v90 = vpop.f32.mrb[0].mxu0
  %91 = vmatprep.mubr.bf16.mxu0 0
  %92 = vmatmul.mubr.bf16.gmra.mrb[0].mxu0 %v49
  %v93 = vpop.f32.mrb[0].mxu0
  %v94 = vadd.f32 %v30, %v93
  %v95 = vpop.f32.mrb[0].mxu0
  %v96 = vpop.f32.mrb[0].mxu0
  %v97 = vadd.f32 %v30, %v96
  %v98 = vpop.f32.mrb[0].mxu0
  %99 = vdwg.mxu0
  %100 = vst.msk [vmem:[%s3] sm:$0xff] %vm44, %v86
  %101 = vst.msk [vmem:[%s3 + $0x8] sm:$0xff] %vm44, %v89
  %102 = vst.msk [vmem:[%s3 + $0x10] sm:$0xff] %vm44, %v94
  %103 = vst.msk [vmem:[%s3 + $0x18] sm:$0xff] %vm44, %v97
  // Predicated region
  $region14: #{multi_headed_attention_forward.4} parent=0 // pred_check
    _
  $region15: #{multi_headed_attention_forward.4} parent=0 // pred_check_branch
    %105 = sbr.rel (0) target = $region17
  $region16: #{multi_headed_attention_forward.4} parent=0 // pred_region
    _
  $region17: #{multi_headed_attention_forward.4} parent=0 // pred_fallthru
    _
  // Predicated region
  $region18: #{multi_headed_attention_forward.4} parent=0 // pred_check
    _
  $region19: #{multi_headed_attention_forward.4} parent=0 // pred_check_branch
    %107 = sbr.rel (0) target = $region21
  $region20: #{multi_headed_attention_forward.4} parent=0 // pred_region
    _
  $region21: #{multi_headed_attention_forward.4} parent=0 // pred_fallthru
    _

// kernel: multi_headed_attention_forward.7
$region0: #{multi_headed_attention_forward.7}
  #allocation0 [shape = 'u32[]', space=smem, size = 0x4, offset = 0x4, fixed_abs, tag = 'smem constant byte address 0x4 - core index']
  #allocation1 [shape = 'u32[144,128]{1,0:T(1,128)}', space=vmem, size = 0x12000, scoped, tag = 'internal scratch']
  %s0 = inlined_call_operand.vmem [shape: f32[32,32], index: 0, kind: input, shape index: {}]
  %s1 = inlined_call_operand.vmem [shape: bf16[32,32], index: 1, kind: input, shape index: {}]
  %s2 = inlined_call_operand.vmem [shape: f32[1,32], index: 2, kind: input, shape index: {}]
  %s3 = inlined_call_operand.hbm [shape: f32[32,32], index: 3, kind: output, shape index: {}]
  %s4 = sld [smem:[#allocation0]]
  $region22: #{multi_headed_attention_forward.7} parent=0
    _
  %s6 = ssub.s32 1, %s4
  %s7 = scalar_select 0, %s6, %s4
  $region1: #{multi_headed_attention_forward.7} parent=0
    #allocation2 [shape = 'u8[16384]{0}', space=vmem, size = 0x4000, scoped, tag = 'output window, operand 0, single buffered']
    #allocation3 [shape = 's32[1]{0}', space=sflag, size = 0x4, scoped, tag = 'scoped memory for multi_headed_attention_forward.7']
    %8 = vsyncpa [#allocation3], 0
    // Predicated region
    $region2: #{multi_headed_attention_forward.7} parent=1 // pred_check
      _
    $region3: #{multi_headed_attention_forward.7} parent=1 // pred_check_branch
      %10 = sbr.rel (0) target = $region5
    $region4: #{multi_headed_attention_forward.7} parent=1 // pred_region
      _
    $region5: #{multi_headed_attention_forward.7} parent=1 // pred_fallthru
      _
    // Predicated region
    $region6: #{multi_headed_attention_forward.7} parent=1 // pred_check
      _
    $region7: #{multi_headed_attention_forward.7} parent=1 // pred_check_branch
      %12 = sbr.rel (0) target = $region9
    $region8: #{multi_headed_attention_forward.7} parent=1 // pred_region
      _
    $region9: #{multi_headed_attention_forward.7} parent=1 // pred_fallthru
      _
    // Predicated region
    $region10: #{multi_headed_attention_forward.7} parent=1 // pred_check
      _
    $region11: #{multi_headed_attention_forward.7} parent=1 // pred_check_branch
      %14 = sbr.rel (0) target = $region13
    $region12: #{multi_headed_attention_forward.7} parent=1 // pred_region
      _
    $region13: #{multi_headed_attention_forward.7} parent=1 // pred_fallthru
      _
    %v16 = vld [vmem:[%s0] sm:$0xff]
    %v17 = vld [vmem:[%s0 + $0x8] sm:$0xff]
    %v18 = vld [vmem:[%s0 + $0x10] sm:$0xff]
    %v19 = vld [vmem:[%s0 + $0x18] sm:$0xff]
    %v20 = vpack.c.bf16 %v17, %v16
    %v21 = vpack.c.bf16 %v19, %v18
    %v22 = vld [vmem:[%s1] sm:$0xf]
    %v23 = vld [vmem:[%s1 + $0x4] sm:$0xf]
    %v24 = vld [vmem:[%s1 + $0x8] sm:$0xf]
    %v25 = vld [vmem:[%s1 + $0xc] sm:$0xf]
    %v26 = vld [vmem:[%s2] sm:$0x1]
    %v28 = vlaneseq
    %v29 = vshrl.u32 %v28, 7
    %v30 = vsub.s32 0, %v29
    %v31 = vrot.slane %v26, %v30
    %v37 = vunpack.c.l.b16 %v22
    %v38 = vunpack.c.l.b16 %v23
    %v39 = vunpack.c.l.b16 %v24
    %v40 = vunpack.c.l.b16 %v25
    %v41 = vpack.c.b16 %v38, %v37
    %v42 = vpack.c.b16 %v40, %v39
    %vm45 = vcmask 261120
    %v47 = vsel %vm45, %v20, 0
    %v50 = vsel %vm45, %v21, 0
    %52 = vmatprep.subr.bf16.mxu0 0
    %53 = vmatpush1.bf16.msra.mxu0 %v41
    %54 = vmatprep.subr.bf16.mxu0 0
    %55 = vmatpush1.bf16.msra.mxu0 %v42
    %56 = vmatprep.subr.bf16.mxu0 0
    %57 = vmatpush1.bf16.msra.mxu0 0
    %58 = vmatprep.subr.bf16.mxu0 0
    %59 = vmatpush1.bf16.msra.mxu0 0
    %60 = vmatprep.subr.bf16.mxu0 0
    %61 = vmatpush1.bf16.msra.mxu0 0
    %62 = vmatprep.subr.bf16.mxu0 0
    %63 = vmatpush1.bf16.msra.mxu0 0
    %64 = vmatprep.subr.bf16.mxu0 0
    %65 = vmatpush1.bf16.msra.mxu0 0
    %66 = vmatprep.subr.bf16.mxu0 0
    %67 = vmatpush1.bf16.msra.mxu0 0
    %68 = vmatprep.subr.bf16.mxu0 0
    %69 = vmatpush1.bf16.msra.mxu0 0
    %70 = vmatprep.subr.bf16.mxu0 0
    %71 = vmatpush1.bf16.msra.mxu0 0
    %72 = vmatprep.subr.bf16.mxu0 0
    %73 = vmatpush1.bf16.msra.mxu0 0
    %74 = vmatprep.subr.bf16.mxu0 0
    %75 = vmatpush1.bf16.msra.mxu0 0
    %76 = vmatprep.subr.bf16.mxu0 0
    %77 = vmatpush1.bf16.msra.mxu0 0
    %78 = vmatprep.subr.bf16.mxu0 0
    %79 = vmatpush1.bf16.msra.mxu0 0
    %80 = vmatprep.subr.bf16.mxu0 0
    %81 = vmatpush1.bf16.msra.mxu0 0
    %82 = vmatprep.subr.bf16.mxu0 0
    %83 = vmatpush1.bf16.msra.mxu0 0
    %84 = vmatprep.mubr.bf16.mxu0 0
    %85 = vmatmul.mubr.bf16.gmra.mrb[0].mxu0 %v47
    %v86 = vpop.f32.mrb[0].mxu0
    %v87 = vadd.f32 %v31, %v86
    %v88 = vpop.f32.mrb[0].mxu0
    %v89 = vpop.f32.mrb[0].mxu0
    %v90 = vadd.f32 %v31, %v89
    %v91 = vpop.f32.mrb[0].mxu0
    %92 = vmatprep.mubr.bf16.mxu0 0
    %93 = vmatmul.mubr.bf16.gmra.mrb[0].mxu0 %v50
    %v94 = vpop.f32.mrb[0].mxu0
    %v95 = vadd.f32 %v31, %v94
    %v96 = vpop.f32.mrb[0].mxu0
    %v97 = vpop.f32.mrb[0].mxu0
    %v98 = vadd.f32 %v31, %v97
    %v99 = vpop.f32.mrb[0].mxu0
    %100 = vdwg.mxu0
    %101 = vst.msk [vmem:[#allocation2] sm:$0xff] %vm45, %v87
    %102 = vst.msk [vmem:[#allocation2 + $0x8] sm:$0xff] %vm45, %v90
    %103 = vst.msk [vmem:[#allocation2 + $0x10] sm:$0xff] %vm45, %v95
    %104 = vst.msk [vmem:[#allocation2 + $0x18] sm:$0xff] %vm45, %v98
    // Predicated region
    $region14: #{multi_headed_attention_forward.7} parent=1 // pred_check
      _
    $region15: #{multi_headed_attention_forward.7} parent=1 // pred_check_branch
      %106 = sbr.rel (0) target = $region17
    $region16: #{multi_headed_attention_forward.7} parent=1 // pred_region
      %s108 = ssub.s32 512, 512
      %109 = vsyncadd [#allocation3], %s108
      %s110 = sshll.u32 [#allocation2], 4
      %s111 = int_to_ptr.vmem [resolvable:$true] %s110
      %116 = dma.vmem_to_hbm [thread:$0]  %s111, 512, %s3, [#allocation3], 128, 128, 8
    $region17: #{multi_headed_attention_forward.7} parent=1 // pred_fallthru
      _
    // Predicated region
    $region18: #{multi_headed_attention_forward.7} parent=1 // pred_check
      _
    $region19: #{multi_headed_attention_forward.7} parent=1 // pred_check_branch
      %118 = sbr.rel (0) target = $region21
    $region20: #{multi_headed_attention_forward.7} parent=1 // pred_region
      %119 = dma.done [#allocation3], 512
    $region21: #{multi_headed_attention_forward.7} parent=1 // pred_fallthru
      _
    %120 = vsyncpa [#allocation3], 1

// kernel: multi_headed_attention_forward.6
$region0: #{multi_headed_attention_forward.6}
  #allocation0 [shape = 'u32[]', space=smem, size = 0x4, offset = 0x4, fixed_abs, tag = 'smem constant byte address 0x4 - core index']
  #allocation1 [shape = 'u32[144,128]{1,0:T(1,128)}', space=vmem, size = 0x12000, scoped, tag = 'internal scratch']
  %s0 = inlined_call_operand.vmem [shape: f32[2,16,16], index: 0, kind: input, shape index: {}]
  %s1 = inlined_call_operand.vmem [shape: f32[2,16,16], index: 1, kind: input, shape index: {}]
  %s2 = inlined_call_operand.vmem [shape: bf16[16,16], index: 2, kind: input, shape index: {}]
  %s3 = inlined_call_operand.vmem [shape: f32[1,16], index: 3, kind: input, shape index: {}]
  %s4 = inlined_call_operand.vmem [shape: bf16[16,16], index: 4, kind: input, shape index: {}]
  %s5 = inlined_call_operand.vmem [shape: f32[1,16], index: 5, kind: input, shape index: {}]
  %s6 = inlined_call_operand.vmem [shape: f32[2,2,16], index: 6, kind: input, shape index: {}]
  %s7 = inlined_call_operand.vmem [shape: f32[2,16,16], index: 7, kind: output, shape index: {}]
  %s8 = sld [smem:[#allocation0]]
  $region61: #{multi_headed_attention_forward.6} parent=0
    _
  %s10 = ssub.s32 1, %s8
  %s11 = scalar_select 0, %s10, %s8
  loop: start=0, step=1, limit=4
  $region2: #{multi_headed_attention_forward.6} parent=0 // loop_pre_header
    _
  $region3: #{multi_headed_attention_forward.6} parent=0 // loop_header
    %s13 = sphi 0, %s17
    %p14 = scmp.ge.s32.totalorder %s13, 4
    %s23 = sphi 0, %s25
    %s26 = sphi 0, %s23
    %s27 = sphi 0, %s26
    %s43 = sphi 0, %s27
    %s49 = sphi 0, %s51
    %s52 = sphi 0, %s49
    %s53 = sphi 0, %s52
    %s69 = sphi 0, %s53
    %s73 = sphi 0, %s73
    %s75 = sphi 0, %s73
    %s76 = sphi 0, %s75
    %s90 = sphi 0, %s76
    %s94 = sphi 0, %s94
    %s96 = sphi 0, %s94
    %s97 = sphi 0, %s96
    %s111 = sphi 0, %s97
    %s115 = sphi 0, %s115
    %s117 = sphi 0, %s115
    %s118 = sphi 0, %s117
    %s132 = sphi 0, %s118
    %s136 = sphi 0, %s136
    %s138 = sphi 0, %s136
    %s139 = sphi 0, %s138
    %s153 = sphi 0, %s139
    %s159 = sphi 0, %s161
    %s162 = sphi 0, %s159
    %s163 = sphi 0, %s162
    %s179 = sphi 0, %s163
    %s185 = sphi 0, %s187
    %s188 = sphi 0, %s185
    %s189 = sphi 0, %s188
    %s205 = sphi 0, %s189
  $region4: #{multi_headed_attention_forward.6} parent=0 // loop_header_branch
    %16 = sbr.rel (%p14) target = $region8
  $region5: #{multi_headed_attention_forward.6} parent=0 // loop_body
    %s18 = ssub.s32 %s13, 1
    %s19 = ssub.s32 %s13, 2
    %s20 = sadd.s32 %s13, 1
    %s21 = ssub.s32 %s13, %s20
    %p22 = scmp.eq.s32.totalorder %s21, 0
    %s24 = sadd.s32 %s23, 1
    %s25 = scalar_select %p22, %s23, %s24
    %p28 = pneg %p22
    %p29 = scmp.eq.s32.totalorder %s13, 1
    %p30 = por %p28, %p29
    %p31 = scmp.ne.s32.totalorder %s23, %s26
    %p32 = scmp.eq.s32.totalorder %s13, 0
    %p33 = por %p31, %p32
    %p34 = scmp.ne.s32.totalorder %s23, %s26
    %p35 = scmp.eq.s32.totalorder %s18, 1
    %p36 = por %p34, %p35
    %p37 = scmp.ne.s32.totalorder %s26, %s27
    %p38 = scmp.eq.s32.totalorder %s18, 0
    %p39 = por %p37, %p38
    %p40 = scmp.ne.s32.totalorder %s26, %s27
    %p41 = scmp.eq.s32.totalorder %s19, 1
    %p42 = por %p40, %p41
    %p44 = scmp.ne.s32.totalorder %s27, %s43
    %p45 = scmp.eq.s32.totalorder %s19, 0
    %p46 = por %p44, %p45
    %s47 = ssub.s32 %s13, %s20
    %p48 = scmp.eq.s32.totalorder %s47, 0
    %s50 = sadd.s32 %s49, 1
    %s51 = scalar_select %p48, %s49, %s50
    %p54 = pneg %p48
    %p55 = scmp.eq.s32.totalorder %s13, 1
    %p56 = por %p54, %p55
    %p57 = scmp.ne.s32.totalorder %s49, %s52
    %p58 = scmp.eq.s32.totalorder %s13, 0
    %p59 = por %p57, %p58
    %p60 = scmp.ne.s32.totalorder %s49, %s52
    %p61 = scmp.eq.s32.totalorder %s18, 1
    %p62 = por %p60, %p61
    %p63 = scmp.ne.s32.totalorder %s52, %s53
    %p64 = scmp.eq.s32.totalorder %s18, 0
    %p65 = por %p63, %p64
    %p66 = scmp.ne.s32.totalorder %s52, %s53
    %p67 = scmp.eq.s32.totalorder %s19, 1
    %p68 = por %p66, %p67
    %p70 = scmp.ne.s32.totalorder %s53, %s69
    %p71 = scmp.eq.s32.totalorder %s19, 0
    %p72 = por %p70, %p71
    %s74 = sadd.s32 %s73, 1
    %p77 = scmp.eq.s32.totalorder %s13, 1
    %p78 = scmp.ne.s32.totalorder %s73, %s75
    %p79 = scmp.eq.s32.totalorder %s13, 0
    %p80 = por %p78, %p79
    %p81 = scmp.ne.s32.totalorder %s73, %s75
    %p82 = scmp.eq.s32.totalorder %s18, 1
    %p83 = por %p81, %p82
    %p84 = scmp.ne.s32.totalorder %s75, %s76
    %p85 = scmp.eq.s32.totalorder %s18, 0
    %p86 = por %p84, %p85
    %p87 = scmp.ne.s32.totalorder %s75, %s76
    %p88 = scmp.eq.s32.totalorder %s19, 1
    %p89 = por %p87, %p88
    %p91 = scmp.ne.s32.totalorder %s76, %s90
    %p92 = scmp.eq.s32.totalorder %s19, 0
    %p93 = por %p91, %p92
    %s95 = sadd.s32 %s94, 1
    %p98 = scmp.eq.s32.totalorder %s13, 1
    %p99 = scmp.ne.s32.totalorder %s94, %s96
    %p100 = scmp.eq.s32.totalorder %s13, 0
    %p101 = por %p99, %p100
    %p102 = scmp.ne.s32.totalorder %s94, %s96
    %p103 = scmp.eq.s32.totalorder %s18, 1
    %p104 = por %p102, %p103
    %p105 = scmp.ne.s32.totalorder %s96, %s97
    %p106 = scmp.eq.s32.totalorder %s18, 0
    %p107 = por %p105, %p106
    %p108 = scmp.ne.s32.totalorder %s96, %s97
    %p109 = scmp.eq.s32.totalorder %s19, 1
    %p110 = por %p108, %p109
    %p112 = scmp.ne.s32.totalorder %s97, %s111
    %p113 = scmp.eq.s32.totalorder %s19, 0
    %p114 = por %p112, %p113
    %s116 = sadd.s32 %s115, 1
    %p119 = scmp.eq.s32.totalorder %s13, 1
    %p120 = scmp.ne.s32.totalorder %s115, %s117
    %p121 = scmp.eq.s32.totalorder %s13, 0
    %p122 = por %p120, %p121
    %p123 = scmp.ne.s32.totalorder %s115, %s117
    %p124 = scmp.eq.s32.totalorder %s18, 1
    %p125 = por %p123, %p124
    %p126 = scmp.ne.s32.totalorder %s117, %s118
    %p127 = scmp.eq.s32.totalorder %s18, 0
    %p128 = por %p126, %p127
    %p129 = scmp.ne.s32.totalorder %s117, %s118
    %p130 = scmp.eq.s32.totalorder %s19, 1
    %p131 = por %p129, %p130
    %p133 = scmp.ne.s32.totalorder %s118, %s132
    %p134 = scmp.eq.s32.totalorder %s19, 0
    %p135 = por %p133, %p134
    %s137 = sadd.s32 %s136, 1
    %p140 = scmp.eq.s32.totalorder %s13, 1
    %p141 = scmp.ne.s32.totalorder %s136, %s138
    %p142 = scmp.eq.s32.totalorder %s13, 0
    %p143 = por %p141, %p142
    %p144 = scmp.ne.s32.totalorder %s136, %s138
    %p145 = scmp.eq.s32.totalorder %s18, 1
    %p146 = por %p144, %p145
    %p147 = scmp.ne.s32.totalorder %s138, %s139
    %p148 = scmp.eq.s32.totalorder %s18, 0
    %p149 = por %p147, %p148
    %p150 = scmp.ne.s32.totalorder %s138, %s139
    %p151 = scmp.eq.s32.totalorder %s19, 1
    %p152 = por %p150, %p151
    %p154 = scmp.ne.s32.totalorder %s139, %s153
    %p155 = scmp.eq.s32.totalorder %s19, 0
    %p156 = por %p154, %p155
    %s157 = ssub.s32 %s13, %s20
    %p158 = scmp.eq.s32.totalorder %s157, 0
    %s160 = sadd.s32 %s159, 1
    %s161 = scalar_select %p158, %s159, %s160
    %p164 = pneg %p158
    %p165 = scmp.eq.s32.totalorder %s13, 1
    %p166 = por %p164, %p165
    %p167 = scmp.ne.s32.totalorder %s159, %s162
    %p168 = scmp.eq.s32.totalorder %s13, 0
    %p169 = por %p167, %p168
    %p170 = scmp.ne.s32.totalorder %s159, %s162
    %p171 = scmp.eq.s32.totalorder %s18, 1
    %p172 = por %p170, %p171
    %p173 = scmp.ne.s32.totalorder %s162, %s163
    %p174 = scmp.eq.s32.totalorder %s18, 0
    %p175 = por %p173, %p174
    %p176 = scmp.ne.s32.totalorder %s162, %s163
    %p177 = scmp.eq.s32.totalorder %s19, 1
    %p178 = por %p176, %p177
    %p180 = scmp.ne.s32.totalorder %s163, %s179
    %p181 = scmp.eq.s32.totalorder %s19, 0
    %p182 = por %p180, %p181
    %s183 = ssub.s32 %s13, %s20
    %p184 = scmp.eq.s32.totalorder %s183, 0
    %s186 = sadd.s32 %s185, 1
    %s187 = scalar_select %p184, %s185, %s186
    %p190 = pneg %p184
    %p191 = scmp.eq.s32.totalorder %s13, 1
    %p192 = por %p190, %p191
    %p193 = scmp.ne.s32.totalorder %s185, %s188
    %p194 = scmp.eq.s32.totalorder %s13, 0
    %p195 = por %p193, %p194
    %p196 = scmp.ne.s32.totalorder %s185, %s188
    %p197 = scmp.eq.s32.totalorder %s18, 1
    %p198 = por %p196, %p197
    %p199 = scmp.ne.s32.totalorder %s188, %s189
    %p200 = scmp.eq.s32.totalorder %s18, 0
    %p201 = por %p199, %p200
    %p202 = scmp.ne.s32.totalorder %s188, %s189
    %p203 = scmp.eq.s32.totalorder %s19, 1
    %p204 = por %p202, %p203
    %p206 = scmp.ne.s32.totalorder %s189, %s205
    %p207 = scmp.eq.s32.totalorder %s19, 0
    %p208 = por %p206, %p207
    %p209 = scmp.le.s32.totalorder 1, %s13
    %p210 = scmp.lt.s32.totalorder %s13, 3
    %p211 = pnand %p209, %p210
    %p212 = pneg %p211
    // Predicated region
    $region9: #{multi_headed_attention_forward.6} parent=5 // pred_check
      _
    $region10: #{multi_headed_attention_forward.6} parent=5 // pred_check_branch
      %214 = sbr.rel (%p211) target = $region12
    $region11: #{multi_headed_attention_forward.6} parent=5 // pred_region
      %s215 = ssub.s32 %s13, 1
      // Predicated region
      $region13: #{multi_headed_attention_forward.6} parent=11 // pred_check
        %p216 = pneg %p86
      $region14: #{multi_headed_attention_forward.6} parent=11 // pred_check_branch
        %218 = sbr.rel (%p216) target = $region16
      $region15: #{multi_headed_attention_forward.6} parent=11 // pred_region
        _
      $region16: #{multi_headed_attention_forward.6} parent=11 // pred_fallthru
        _
      // Predicated region
      $region17: #{multi_headed_attention_forward.6} parent=11 // pred_check
        %p219 = pneg %p107
      $region18: #{multi_headed_attention_forward.6} parent=11 // pred_check_branch
        %221 = sbr.rel (%p219) target = $region20
      $region19: #{multi_headed_attention_forward.6} parent=11 // pred_region
        _
      $region20: #{multi_headed_attention_forward.6} parent=11 // pred_fallthru
        _
      // Predicated region
      $region21: #{multi_headed_attention_forward.6} parent=11 // pred_check
        %p222 = pneg %p128
      $region22: #{multi_headed_attention_forward.6} parent=11 // pred_check_branch
        %224 = sbr.rel (%p222) target = $region24
      $region23: #{multi_headed_attention_forward.6} parent=11 // pred_region
        _
      $region24: #{multi_headed_attention_forward.6} parent=11 // pred_fallthru
        _
      // Predicated region
      $region25: #{multi_headed_attention_forward.6} parent=11 // pred_check
        %p225 = pneg %p149
      $region26: #{multi_headed_attention_forward.6} parent=11 // pred_check_branch
        %227 = sbr.rel (%p225) target = $region28
      $region27: #{multi_headed_attention_forward.6} parent=11 // pred_region
        _
      $region28: #{multi_headed_attention_forward.6} parent=11 // pred_fallthru
        _
    $region12: #{multi_headed_attention_forward.6} parent=5 // pred_fallthru
      _
    %p228 = scmp.lt.s32.totalorder %s13, 2
    // Predicated region
    $region29: #{multi_headed_attention_forward.6} parent=5 // pred_check
      %p229 = pneg %p228
    $region30: #{multi_headed_attention_forward.6} parent=5 // pred_check_branch
      %231 = sbr.rel (%p229) target = $region32
    $region31: #{multi_headed_attention_forward.6} parent=5 // pred_region
      // Predicated region
      $region33: #{multi_headed_attention_forward.6} parent=31 // pred_check
        %p232 = pneg %p33
      $region34: #{multi_headed_attention_forward.6} parent=31 // pred_check_branch
        %234 = sbr.rel (%p232) target = $region36
      $region35: #{multi_headed_attention_forward.6} parent=31 // pred_region
        %p235 = scmp.lt.s32.totalorder %s13, 1
        %s236 = scalar_select %p235, %s13, 1
        %s237 = smul.addr %s236, 2
        %s238 = smul.addr %s237, 8
        %s239 = scalar_lea.vmem %s0, %s238
      $region36: #{multi_headed_attention_forward.6} parent=31 // pred_fallthru
        _
      // Predicated region
      $region37: #{multi_headed_attention_forward.6} parent=31 // pred_check
        %p240 = pneg %p59
      $region38: #{multi_headed_attention_forward.6} parent=31 // pred_check_branch
        %242 = sbr.rel (%p240) target = $region40
      $region39: #{multi_headed_attention_forward.6} parent=31 // pred_region
        %p243 = scmp.lt.s32.totalorder %s13, 1
        %s244 = scalar_select %p243, %s13, 1
        %s245 = smul.addr %s244, 2
        %s246 = smul.addr %s245, 8
        %s247 = scalar_lea.vmem %s1, %s246
      $region40: #{multi_headed_attention_forward.6} parent=31 // pred_fallthru
        _
      // Predicated region
      $region41: #{multi_headed_attention_forward.6} parent=31 // pred_check
        %p248 = pneg %p169
      $region42: #{multi_headed_attention_forward.6} parent=31 // pred_check_branch
        %250 = sbr.rel (%p248) target = $region44
      $region43: #{multi_headed_attention_forward.6} parent=31 // pred_region
        %p251 = scmp.lt.s32.totalorder %s13, 1
        %s252 = scalar_select %p251, %s13, 1
        %s253 = smul.addr %s252, 2
        %s254 = scalar_lea.vmem %s6, %s253
      $region44: #{multi_headed_attention_forward.6} parent=31 // pred_fallthru
        _
    $region32: #{multi_headed_attention_forward.6} parent=5 // pred_fallthru
      _
    %p255 = scmp.le.s32.totalorder 1, %s13
    %p256 = scmp.lt.s32.totalorder %s13, 3
    %p257 = pnand %p255, %p256
    %p258 = pneg %p257
    // Predicated region
    $region45: #{multi_headed_attention_forward.6} parent=5 // pred_check
      _
    $region46: #{multi_headed_attention_forward.6} parent=5 // pred_check_branch
      %260 = sbr.rel (%p257) target = $region48
    $region47: #{multi_headed_attention_forward.6} parent=5 // pred_region
      %s261 = ssub.s32 %s13, 1
      %p262 = scmp.lt.s32.totalorder %s18, 1
      %s263 = scalar_select %p262, %s18, 1
      %s264 = smul.addr %s263, 2
      %s265 = smul.addr %s264, 8
      %s266 = scalar_lea.vmem %s0, %s265
      %p267 = pneg %p39
      %p268 = pneg %p36
      %p269 = scmp.lt.s32.totalorder %s18, 1
      %s270 = scalar_select %p269, %s18, 1
      %s271 = smul.addr %s270, 2
      %s272 = smul.addr %s271, 8
      %s273 = scalar_lea.vmem %s1, %s272
      %p274 = pneg %p65
      %p275 = pneg %p62
      %p276 = pneg %p86
      %p277 = pneg %p83
      %p278 = pneg %p107
      %p279 = pneg %p104
      %p280 = pneg %p128
      %p281 = pneg %p125
      %p282 = pneg %p149
      %p283 = pneg %p146
      %p284 = scmp.lt.s32.totalorder %s18, 1
      %s285 = scalar_select %p284, %s18, 1
      %s286 = smul.addr %s285, 2
      %s287 = scalar_lea.vmem %s6, %s286
      %p288 = pneg %p175
      %p289 = pneg %p172
      %p290 = pneg %p201
      %p291 = pneg %p198
      %p292 = scmp.lt.s32.totalorder %s18, 1
      %s293 = scalar_select %p292, %s18, 1
      %s294 = smul.addr %s293, 2
      %s295 = smul.addr %s294, 8
      %s296 = scalar_lea.vmem %s7, %s295
      %p297 = scmp.lt.s32.totalorder %s18, 1
      %s298 = scalar_select %p297, %s18, 1
      %s299 = smul.addr %s298, 2
      %s300 = smul.addr %s299, 8
      %s301 = scalar_lea.vmem %s0, %s300
      %p302 = scmp.lt.s32.totalorder %s18, 1
      %s303 = scalar_select %p302, %s18, 1
      %s304 = smul.addr %s303, 2
      %s305 = smul.addr %s304, 8
      %s306 = scalar_lea.vmem %s1, %s305
      %p307 = scmp.lt.s32.totalorder %s18, 1
      %s308 = scalar_select %p307, %s18, 1
      %s309 = smul.addr %s308, 2
      %s310 = scalar_lea.vmem %s6, %s309
      %p311 = scmp.lt.s32.totalorder %s18, 1
      %s312 = scalar_select %p311, %s18, 1
      %s313 = smul.addr %s312, 2
      %s314 = smul.addr %s313, 8
      %s315 = scalar_lea.vmem %s7, %s314
      %v317 = vld [vmem:[%s301] sm:$0xff]
      %v318 = vld [vmem:[%s301 + $0x8] sm:$0xff]
      %v319 = vmul.f32 %v317, 0.35355338
      %v320 = vmul.f32 %v318, 0.35355338
      %v321 = vpack.c.bf16 %v320, %v319
      %v322 = vld [vmem:[%s306] sm:$0xff]
      %v323 = vld [vmem:[%s306 + $0x8] sm:$0xff]
      %v324 = vpack.c.bf16 %v323, %v322
      %v325 = vld [vmem:[%s2] sm:$0xf]
      %v326 = vld [vmem:[%s2 + $0x4] sm:$0xf]
      %v327 = vld [vmem:[%s3] sm:$0x1]
      %v329 = vlaneseq
      %v330 = vshrl.u32 %v329, 7
      %v331 = vsub.s32 0, %v330
      %v332 = vrot.slane %v327, %v331
      %v336 = vunpack.c.l.b16 %v325
      %v337 = vunpack.c.l.b16 %v326
      %v338 = vpack.c.b16 %v337, %v336
      %vm340 = vcmask 130048
      %v342 = vsel %vm340, %v324, 0
      %344 = vmatprep.subr.bf16.mxu0 0
      %345 = vmatpush1.bf16.msra.mxu0 %v338
      %346 = vmatprep.subr.bf16.mxu0 0
      %347 = vmatpush1.bf16.msra.mxu0 0
      %348 = vmatprep.subr.bf16.mxu0 0
      %349 = vmatpush1.bf16.msra.mxu0 0
      %350 = vmatprep.subr.bf16.mxu0 0
      %351 = vmatpush1.bf16.msra.mxu0 0
      %352 = vmatprep.subr.bf16.mxu0 0
      %353 = vmatpush1.bf16.msra.mxu0 0
      %354 = vmatprep.subr.bf16.mxu0 0
      %355 = vmatpush1.bf16.msra.mxu0 0
      %356 = vmatprep.subr.bf16.mxu0 0
      %357 = vmatpush1.bf16.msra.mxu0 0
      %358 = vmatprep.subr.bf16.mxu0 0
      %359 = vmatpush1.bf16.msra.mxu0 0
      %360 = vmatprep.subr.bf16.mxu0 0
      %361 = vmatpush1.bf16.msra.mxu0 0
      %362 = vmatprep.subr.bf16.mxu0 0
      %363 = vmatpush1.bf16.msra.mxu0 0
      %364 = vmatprep.subr.bf16.mxu0 0
      %365 = vmatpush1.bf16.msra.mxu0 0
      %366 = vmatprep.subr.bf16.mxu0 0
      %367 = vmatpush1.bf16.msra.mxu0 0
      %368 = vmatprep.subr.bf16.mxu0 0
      %369 = vmatpush1.bf16.msra.mxu0 0
      %370 = vmatprep.subr.bf16.mxu0 0
      %371 = vmatpush1.bf16.msra.mxu0 0
      %372 = vmatprep.subr.bf16.mxu0 0
      %373 = vmatpush1.bf16.msra.mxu0 0
      %374 = vmatprep.subr.bf16.mxu0 0
      %375 = vmatpush1.bf16.msra.mxu0 0
      %376 = vmatprep.mubr.bf16.mxu0 0
      %377 = vmatmul.mubr.bf16.gmra.mrb[0].mxu0 %v342
      %v378 = vpop.f32.mrb[0].mxu0
      %v379 = vadd.f32 %v332, %v378
      %v380 = vpop.f32.mrb[0].mxu0
      %v381 = vpop.f32.mrb[0].mxu0
      %v382 = vadd.f32 %v332, %v381
      %v383 = vpop.f32.mrb[0].mxu0
      %384 = vdwg.mxu0
      %v385 = vpack.c.bf16 %v382, %v379
      %v386 = vld [vmem:[%s4] sm:$0xf]
      %v387 = vld [vmem:[%s4 + $0x4] sm:$0xf]
      %v388 = vld [vmem:[%s5] sm:$0x1]
      %v390 = vlaneseq
      %v391 = vshrl.u32 %v390, 7
      %v392 = vsub.s32 0, %v391
      %v393 = vrot.slane %v388, %v392
      %v397 = vunpack.c.l.b16 %v386
      %v398 = vunpack.c.l.b16 %v387
      %v399 = vpack.c.b16 %v398, %v397
      %401 = vmatprep.subr.bf16.mxu0 0
      %402 = vmatpush1.bf16.msra.mxu0 %v399
      %403 = vmatprep.subr.bf16.mxu0 0
      %404 = vmatpush1.bf16.msra.mxu0 0
      %405 = vmatprep.subr.bf16.mxu0 0
      %406 = vmatpush1.bf16.msra.mxu0 0
      %407 = vmatprep.subr.bf16.mxu0 0
      %408 = vmatpush1.bf16.msra.mxu0 0
      %409 = vmatprep.subr.bf16.mxu0 0
      %410 = vmatpush1.bf16.msra.mxu0 0
      %411 = vmatprep.subr.bf16.mxu0 0
      %412 = vmatpush1.bf16.msra.mxu0 0
      %413 = vmatprep.subr.bf16.mxu0 0
      %414 = vmatpush1.bf16.msra.mxu0 0
      %415 = vmatprep.subr.bf16.mxu0 0
      %416 = vmatpush1.bf16.msra.mxu0 0
      %417 = vmatprep.subr.bf16.mxu0 0
      %418 = vmatpush1.bf16.msra.mxu0 0
      %419 = vmatprep.subr.bf16.mxu0 0
      %420 = vmatpush1.bf16.msra.mxu0 0
      %421 = vmatprep.subr.bf16.mxu0 0
      %422 = vmatpush1.bf16.msra.mxu0 0
      %423 = vmatprep.subr.bf16.mxu0 0
      %424 = vmatpush1.bf16.msra.mxu0 0
      %425 = vmatprep.subr.bf16.mxu0 0
      %426 = vmatpush1.bf16.msra.mxu0 0
      %427 = vmatprep.subr.bf16.mxu0 0
      %428 = vmatpush1.bf16.msra.mxu0 0
      %429 = vmatprep.subr.bf16.mxu0 0
      %430 = vmatpush1.bf16.msra.mxu0 0
      %431 = vmatprep.subr.bf16.mxu0 0
      %432 = vmatpush1.bf16.msra.mxu0 0
      %433 = vmatprep.mubr.bf16.mxu0 0
      %434 = vmatmul.mubr.bf16.gmra.mrb[0].mxu0 %v342
      %v435 = vpop.f32.mrb[0].mxu0
      %v436 = vadd.f32 %v393, %v435
      %v437 = vpop.f32.mrb[0].mxu0
      %v438 = vpop.f32.mrb[0].mxu0
      %v439 = vadd.f32 %v393, %v438
      %v440 = vpop.f32.mrb[0].mxu0
      %441 = vdwg.mxu0
      %v442 = vpack.c.bf16 %v439, %v436
      %v443 = vld [vmem:[%s310] sm:$0x3]
      %v444 = vlaneseq
      %v445 = vshrl.u32 %v444, 7
      %v446 = vsub.s32 0, %v445
      %v447 = vrot.slane %v443, %v446
      %vm448 = vcmask 64512
      %v450 = vsel %vm448, %v321, 0
      %v453 = vsel %vm448, %v385, 0
      %455 = vmatprep.subr.bf16.mxu0 0
      %456 = vmatpush1.bf16.xpose.msra.mxu0 %v453
      %457 = vmatprep.subr.bf16.mxu0 0
      %458 = vmatpush1.bf16.xpose.msra.mxu0 0
      %459 = vmatprep.subr.bf16.mxu0 0
      %460 = vmatpush1.bf16.xpose.msra.mxu0 0
      %461 = vmatprep.subr.bf16.mxu0 0
      %462 = vmatpush1.bf16.xpose.msra.mxu0 0
      %463 = vmatprep.subr.bf16.mxu0 0
      %464 = vmatpush1.bf16.xpose.msra.mxu0 0
      %465 = vmatprep.subr.bf16.mxu0 0
      %466 = vmatpush1.bf16.xpose.msra.mxu0 0
      %467 = vmatprep.subr.bf16.mxu0 0
      %468 = vmatpush1.bf16.xpose.msra.mxu0 0
      %469 = vmatprep.subr.bf16.mxu0 0
      %470 = vmatpush1.bf16.xpose.msra.mxu0 0
      %471 = vmatprep.subr.bf16.mxu0 0
      %472 = vmatpush1.bf16.xpose.msra.mxu0 0
      %473 = vmatprep.subr.bf16.mxu0 0
      %474 = vmatpush1.bf16.xpose.msra.mxu0 0
      %475 = vmatprep.subr.bf16.mxu0 0
      %476 = vmatpush1.bf16.xpose.msra.mxu0 0
      %477 = vmatprep.subr.bf16.mxu0 0
      %478 = vmatpush1.bf16.xpose.msra.mxu0 0
      %479 = vmatprep.subr.bf16.mxu0 0
      %480 = vmatpush1.bf16.xpose.msra.mxu0 0
      %481 = vmatprep.subr.bf16.mxu0 0
      %482 = vmatpush1.bf16.xpose.msra.mxu0 0
      %483 = vmatprep.subr.bf16.mxu0 0
      %484 = vmatpush1.bf16.xpose.msra.mxu0 0
      %485 = vmatprep.subr.bf16.mxu0 0
      %486 = vmatpush1.bf16.xpose.msra.mxu0 0
      %487 = vmatprep.mubr.bf16.mxu0 0
      %488 = vmatmul.mubr.bf16.gmra.mrb[0].mxu0 %v450
      %v489 = vpop.f32.mrb[0].mxu0
      %v490 = vadd.f32 %v447, %v489
      %v491 = vpop.f32.mrb[0].mxu0
      %v492 = vpop.f32.mrb[0].mxu0
      %v493 = vadd.f32 %v447, %v492
      %v494 = vpop.f32.mrb[0].mxu0
      %495 = vdwg.mxu0
      %v496 = vsel %vm340, %v490, -inf
      %497 = vmax.xlane.f32.xlu0 %v496
      %v498 = vpop.xlane.xlu0 %497
      %v499 = vsel %vm340, %v493, -inf
      %500 = vmax.xlane.f32.xlu0 %v499
      %v501 = vpop.xlane.xlu0 %500
      %v502 = vsub.f32 %v490, %v498
      %v503 = vsub.f32 %v493, %v501
      %v504 = vmul.f32 %v502, 1.442695
      %v505 = vpow.pop %v504
      %v506 = vmul.f32 %v503, 1.442695
      %v507 = vpow.pop %v506
      %v508 = vsel %vm340, %v505, 0.0
      %509 = vadd.xlane.f32.xlu0 %v508
      %v510 = vpop.xlane.xlu0 %509
      %v511 = vsel %vm340, %v507, 0.0
      %512 = vadd.xlane.f32.xlu0 %v511
      %v513 = vpop.xlane.xlu0 %512
      %v514 = vrcp.pop %v510
      %v515 = vrcp.pop %v513
      %v516 = vmul.f32 %v505, %v514
      %v517 = vmul.f32 %v507, %v515
      %v518 = vpack.c.bf16 %v517, %v516
      %v520 = vsel %vm340, %v518, 0
      %522 = vmatprep.subr.bf16.mxu0 0
      %523 = vmatpush1.bf16.msra.mxu0 %v442
      %524 = vmatprep.subr.bf16.mxu0 0
      %525 = vmatpush1.bf16.msra.mxu0 0
      %526 = vmatprep.subr.bf16.mxu0 0
      %527 = vmatpush1.bf16.msra.mxu0 0
      %528 = vmatprep.subr.bf16.mxu0 0
      %529 = vmatpush1.bf16.msra.mxu0 0
      %530 = vmatprep.subr.bf16.mxu0 0
      %531 = vmatpush1.bf16.msra.mxu0 0
      %532 = vmatprep.subr.bf16.mxu0 0
      %533 = vmatpush1.bf16.msra.mxu0 0
      %534 = vmatprep.subr.bf16.mxu0 0
      %535 = vmatpush1.bf16.msra.mxu0 0
      %536 = vmatprep.subr.bf16.mxu0 0
      %537 = vmatpush1.bf16.msra.mxu0 0
      %538 = vmatprep.subr.bf16.mxu0 0
      %539 = vmatpush1.bf16.msra.mxu0 0
      %540 = vmatprep.subr.bf16.mxu0 0
      %541 = vmatpush1.bf16.msra.mxu0 0
      %542 = vmatprep.subr.bf16.mxu0 0
      %543 = vmatpush1.bf16.msra.mxu0 0
      %544 = vmatprep.subr.bf16.mxu0 0
      %545 = vmatpush1.bf16.msra.mxu0 0
      %546 = vmatprep.subr.bf16.mxu0 0
      %547 = vmatpush1.bf16.msra.mxu0 0
      %548 = vmatprep.subr.bf16.mxu0 0
      %549 = vmatpush1.bf16.msra.mxu0 0
      %550 = vmatprep.subr.bf16.mxu0 0
      %551 = vmatpush1.bf16.msra.mxu0 0
      %552 = vmatprep.subr.bf16.mxu0 0
      %553 = vmatpush1.bf16.msra.mxu0 0
      %554 = vmatprep.mubr.bf16.mxu0 0
      %555 = vmatmul.mubr.bf16.gmra.mrb[0].mxu0 %v520
      %v556 = vpop.f32.mrb[0].mxu0
      %v557 = vadd.f32 0.0, %v556
      %v558 = vpop.f32.mrb[0].mxu0
      %v559 = vpop.f32.mrb[0].mxu0
      %v560 = vadd.f32 0.0, %v559
      %v561 = vpop.f32.mrb[0].mxu0
      %562 = vdwg.mxu0
      %v563 = vlaneseq
      %v564 = vshrl.u32 %v563, 7
      %v565 = vsub.s32 1, %v564
      %v566 = vrot.slane %v443, %v565
      %568 = vrot.lane.b32.xlu0 %v321, 120
      %v569 = vpop.permute.xlu0 %568
      %571 = vrot.lane.b32.xlu0 %v385, 120
      %v572 = vpop.permute.xlu0 %571
      %v574 = vsel %vm448, %v569, 0
      %v577 = vsel %vm448, %v572, 0
      %579 = vmatprep.subr.bf16.mxu0 0
      %580 = vmatpush1.bf16.xpose.msra.mxu0 %v577
      %581 = vmatprep.subr.bf16.mxu0 0
      %582 = vmatpush1.bf16.xpose.msra.mxu0 0
      %583 = vmatprep.subr.bf16.mxu0 0
      %584 = vmatpush1.bf16.xpose.msra.mxu0 0
      %585 = vmatprep.subr.bf16.mxu0 0
      %586 = vmatpush1.bf16.xpose.msra.mxu0 0
      %587 = vmatprep.subr.bf16.mxu0 0
      %588 = vmatpush1.bf16.xpose.msra.mxu0 0
      %589 = vmatprep.subr.bf16.mxu0 0
      %590 = vmatpush1.bf16.xpose.msra.mxu0 0
      %591 = vmatprep.subr.bf16.mxu0 0
      %592 = vmatpush1.bf16.xpose.msra.mxu0 0
      %593 = vmatprep.subr.bf16.mxu0 0
      %594 = vmatpush1.bf16.xpose.msra.mxu0 0
      %595 = vmatprep.subr.bf16.mxu0 0
      %596 = vmatpush1.bf16.xpose.msra.mxu0 0
      %597 = vmatprep.subr.bf16.mxu0 0
      %598 = vmatpush1.bf16.xpose.msra.mxu0 0
      %599 = vmatprep.subr.bf16.mxu0 0
      %600 = vmatpush1.bf16.xpose.msra.mxu0 0
      %601 = vmatprep.subr.bf16.mxu0 0
      %602 = vmatpush1.bf16.xpose.msra.mxu0 0
      %603 = vmatprep.subr.bf16.mxu0 0
      %604 = vmatpush1.bf16.xpose.msra.mxu0 0
      %605 = vmatprep.subr.bf16.mxu0 0
      %606 = vmatpush1.bf16.xpose.msra.mxu0 0
      %607 = vmatprep.subr.bf16.mxu0 0
      %608 = vmatpush1.bf16.xpose.msra.mxu0 0
      %609 = vmatprep.subr.bf16.mxu0 0
      %610 = vmatpush1.bf16.xpose.msra.mxu0 0
      %611 = vmatprep.mubr.bf16.mxu0 0
      %612 = vmatmul.mubr.bf16.gmra.mrb[0].mxu0 %v574
      %v613 = vpop.f32.mrb[0].mxu0
      %v614 = vadd.f32 %v566, %v613
      %v615 = vpop.f32.mrb[0].mxu0
      %v616 = vpop.f32.mrb[0].mxu0
      %v617 = vadd.f32 %v566, %v616
      %v618 = vpop.f32.mrb[0].mxu0
      %619 = vdwg.mxu0
      %v620 = vsel %vm340, %v614, -inf
      %621 = vmax.xlane.f32.xlu0 %v620
      %v622 = vpop.xlane.xlu0 %621
      %v623 = vsel %vm340, %v617, -inf
      %624 = vmax.xlane.f32.xlu0 %v623
      %v625 = vpop.xlane.xlu0 %624
      %v626 = vsub.f32 %v614, %v622
      %v627 = vsub.f32 %v617, %v625
      %v628 = vmul.f32 %v626, 1.442695
      %v629 = vpow.pop %v628
      %v630 = vmul.f32 %v627, 1.442695
      %v631 = vpow.pop %v630
      %v632 = vsel %vm340, %v629, 0.0
      %633 = vadd.xlane.f32.xlu0 %v632
      %v634 = vpop.xlane.xlu0 %633
      %v635 = vsel %vm340, %v631, 0.0
      %636 = vadd.xlane.f32.xlu0 %v635
      %v637 = vpop.xlane.xlu0 %636
      %v638 = vrcp.pop %v634
      %v639 = vrcp.pop %v637
      %v640 = vmul.f32 %v629, %v638
      %v641 = vmul.f32 %v631, %v639
      %v642 = vpack.c.bf16 %v641, %v640
      %644 = vrot.lane.b32.xlu0 %v442, 120
      %v645 = vpop.permute.xlu0 %644
      %v648 = vsel %vm340, %v642, 0
      %650 = vmatprep.subr.bf16.mxu0 0
      %651 = vmatpush1.bf16.msra.mxu0 %v645
      %652 = vmatprep.subr.bf16.mxu0 0
      %653 = vmatpush1.bf16.msra.mxu0 0
      %654 = vmatprep.subr.bf16.mxu0 0
      %655 = vmatpush1.bf16.msra.mxu0 0
      %656 = vmatprep.subr.bf16.mxu0 0
      %657 = vmatpush1.bf16.msra.mxu0 0
      %658 = vmatprep.subr.bf16.mxu0 0
      %659 = vmatpush1.bf16.msra.mxu0 0
      %660 = vmatprep.subr.bf16.mxu0 0
      %661 = vmatpush1.bf16.msra.mxu0 0
      %662 = vmatprep.subr.bf16.mxu0 0
      %663 = vmatpush1.bf16.msra.mxu0 0
      %664 = vmatprep.subr.bf16.mxu0 0
      %665 = vmatpush1.bf16.msra.mxu0 0
      %666 = vmatprep.subr.bf16.mxu0 0
      %667 = vmatpush1.bf16.msra.mxu0 0
      %668 = vmatprep.subr.bf16.mxu0 0
      %669 = vmatpush1.bf16.msra.mxu0 0
      %670 = vmatprep.subr.bf16.mxu0 0
      %671 = vmatpush1.bf16.msra.mxu0 0
      %672 = vmatprep.subr.bf16.mxu0 0
      %673 = vmatpush1.bf16.msra.mxu0 0
      %674 = vmatprep.subr.bf16.mxu0 0
      %675 = vmatpush1.bf16.msra.mxu0 0
      %676 = vmatprep.subr.bf16.mxu0 0
      %677 = vmatpush1.bf16.msra.mxu0 0
      %678 = vmatprep.subr.bf16.mxu0 0
      %679 = vmatpush1.bf16.msra.mxu0 0
      %680 = vmatprep.subr.bf16.mxu0 0
      %681 = vmatpush1.bf16.msra.mxu0 0
      %682 = vmatprep.mubr.bf16.mxu0 0
      %683 = vmatmul.mubr.bf16.gmra.mrb[0].mxu0 %v648
      %v684 = vpop.f32.mrb[0].mxu0
      %v685 = vadd.f32 0.0, %v684
      %v686 = vpop.f32.mrb[0].mxu0
      %v687 = vpop.f32.mrb[0].mxu0
      %v688 = vadd.f32 0.0, %v687
      %v689 = vpop.f32.mrb[0].mxu0
      %690 = vdwg.mxu0
      %693 = vrot.lane.b32.xlu0 %v685, 8
      %v694 = vpop.permute.xlu0 %693
      %695 = vrot.lane.b32.xlu0 %v688, 8
      %v696 = vpop.permute.xlu0 %695
      %v699 = vsel %vm448, %v557, %v694
      %v700 = vsel %vm448, %v560, %v696
      %701 = vst.msk [vmem:[%s315] sm:$0xff] %vm340, %v699
      %702 = vst.msk [vmem:[%s315 + $0x8] sm:$0xff] %vm340, %v700
      %p703 = scmp.lt.s32.totalorder %s18, 1
      %s704 = scalar_select %p703, %s18, 1
      %s705 = smul.addr %s704, 2
      %s706 = smul.addr %s705, 8
      %s707 = scalar_lea.vmem %s7, %s706
      // Predicated region
      $region49: #{multi_headed_attention_forward.6} parent=47 // pred_check
        %p708 = pneg %p198
      $region50: #{multi_headed_attention_forward.6} parent=47 // pred_check_branch
        %710 = sbr.rel (%p708) target = $region52
      $region51: #{multi_headed_attention_forward.6} parent=47 // pred_region
        _
      $region52: #{multi_headed_attention_forward.6} parent=47 // pred_fallthru
        _
    $region48: #{multi_headed_attention_forward.6} parent=5 // pred_fallthru
      _
    %p711 = scmp.le.s32.totalorder 2, %s13
    // Predicated region
    $region53: #{multi_headed_attention_forward.6} parent=5 // pred_check
      %p712 = pneg %p711
    $region54: #{multi_headed_attention_forward.6} parent=5 // pred_check_branch
      %714 = sbr.rel (%p712) target = $region56
    $region55: #{multi_headed_attention_forward.6} parent=5 // pred_region
      %s715 = ssub.s32 %s13, 2
      // Predicated region
      $region57: #{multi_headed_attention_forward.6} parent=55 // pred_check
        %p716 = pneg %p204
      $region58: #{multi_headed_attention_forward.6} parent=55 // pred_check_branch
        %718 = sbr.rel (%p716) target = $region60
      $region59: #{multi_headed_attention_forward.6} parent=55 // pred_region
        %p719 = scmp.lt.s32.totalorder %s19, 1
        %s720 = scalar_select %p719, %s19, 1
        %s721 = smul.addr %s720, 2
        %s722 = smul.addr %s721, 8
        %s723 = scalar_lea.vmem %s7, %s722
      $region60: #{multi_headed_attention_forward.6} parent=55 // pred_fallthru
        _
    $region56: #{multi_headed_attention_forward.6} parent=5 // pred_fallthru
      _
  $region6: #{multi_headed_attention_forward.6} parent=0 // loop_footer
    %s17 = sadd.s32 1, %s13
  $region7: #{multi_headed_attention_forward.6} parent=0 // loop_footer_branch
    %12 = sbr.rel target = $region3
  $region8: #{multi_headed_attention_forward.6} parent=0 // loop_exit
    _

</llo_original>
